<compile_context>
chip_gen: v7x
topology: tpu7x:2x2x1
jax: 0.10.0
libtpu: 0.0.40
codegen_flags: <defaults>
</compile_context>

<pallas_src>
import functools

import jax
import jax.numpy as jnp
from jax.experimental import pallas as pl
from jax.experimental.pallas import tpu as pltpu


def _tri_mf_kernel(x_ref, o_ref, *, a, b, c, inv_ba, cb):
    # Upcast in-register; HBM traffic stays in the input's native dtype.
    x = x_ref[...].astype(jnp.float32)
    # Rise uses multiply-by-reciprocal and fall uses a true divide, exactly as
    # in the torch forward. Degenerate a==b / b==c use the torch 1.0 branch.
    rise = (x - a) * inv_ba if inv_ba is not None else jnp.ones_like(x)
    fall = (c - x) / cb if cb is not None else jnp.ones_like(x)
    out = jnp.where(
        jnp.logical_and(a < x, x < b),
        rise,
        jnp.where(jnp.logical_and(b <= x, x <= c), fall, jnp.zeros_like(x)),
    )
    o_ref[...] = out.astype(o_ref.dtype)


def triangular_memb_func(x, a, b, c, *, lane_c=512, tile_r=None):
    """Elementwise triangular MF over an arbitrarily shaped tensor.

    a, b, c are Python scalars (compile-time constants mirroring the torch
    module's scalar parameters at a fixed value) with a <= b <= c. Degenerate
    a == b or b == c follows the torch convention (constant 1.0 branch).
    The output preserves the input's floating dtype.
    """
    a = float(a)
    b = float(b)
    c = float(c)
    assert a <= b <= c, "Triangular parameters: must have a <= b <= c."
    inv_ba = None if a == b else 1.0 / (b - a)
    cb = None if b == c else (c - b)

    orig_shape = x.shape
    if not jnp.issubdtype(x.dtype, jnp.floating):
        x = x.astype(jnp.float32)
    dtype = x.dtype
    itemsize = jnp.dtype(dtype).itemsize

    x_flat = jnp.ravel(x)  # free for contiguous inputs (no copy)
    n = x_flat.shape[0]
    if n == 0:
        return jnp.zeros(orig_shape, dtype)

    # lane_c stays modest (512) so a ragged tail needs at most lane_c-1 pad
    # elements; shrink only for genuinely tiny inputs, never below 128 lanes.
    while lane_c > 128 and n < lane_c:
        lane_c //= 2

    # Pad only to the next multiple of lane_c; skipped entirely when n divides.
    n_pad = pl.cdiv(n, lane_c) * lane_c
    padded = n_pad != n
    if padded:
        x_flat = jnp.pad(x_flat, (0, n_pad - n))
    rows = n_pad // lane_c
    x2d = x_flat.reshape(rows, lane_c)

    # Sub-32-bit dtypes pack along sublanes; keep row tiles a multiple of the
    # packing factor.
    min_tile_r = max(8, 32 // itemsize)
    if tile_r is None:
        # ~4 MiB per block regardless of dtype.
        tile_r = max(min_tile_r, (4 * 1024 * 1024) // (lane_c * itemsize))

    # Shrink tile_r (never lane_c) for smaller inputs: aim for >=4 grid steps
    # (keeps both v7x TensorCores busy) and never collapse to a single step
    # when two are possible.
    while tile_r > 256 and rows < 4 * tile_r:
        tile_r //= 2
    while tile_r > min_tile_r and rows < 2 * tile_r:
        tile_r //= 2

    grid = (pl.cdiv(rows, tile_r),)  # ragged last row-tile handled by Pallas
    kernel = functools.partial(
        _tri_mf_kernel, a=a, b=b, c=c, inv_ba=inv_ba, cb=cb
    )

    out2d = pl.pallas_call(
        kernel,
        out_shape=jax.ShapeDtypeStruct((rows, lane_c), dtype),
        grid_spec=pl.GridSpec(
            grid=grid,
            in_specs=[pl.BlockSpec((tile_r, lane_c), lambda i: (i, 0))],
            out_specs=pl.BlockSpec((tile_r, lane_c), lambda i: (i, 0)),
        ),
        compiler_params=pltpu.CompilerParams(
            dimension_semantics=("parallel",),
            vmem_limit_bytes=32 * 1024 * 1024,
        ),
        cost_estimate=pl.CostEstimate(
            flops=10 * n,
            transcendentals=0,
            bytes_accessed=2 * n * itemsize,
        ),
        # NOTE: no input_output_aliases on purpose: in the common (unpadded)
        # path x2d is a zero-copy reshape of the caller's array, and donating
        # it in eager mode would risk clobbering the caller's buffer.
    )(x2d)

    if padded:
        return out2d.reshape(-1)[:n].reshape(orig_shape)
    return out2d.reshape(orig_shape)


def _reference(x, a, b, c):
    xf = x.astype(jnp.float32)
    rise = (xf - a) * (1.0 / (b - a)) if a != b else jnp.ones_like(xf)
    fall = (c - xf) / (c - b) if b != c else jnp.ones_like(xf)
    out = jnp.where(
        (a < xf) & (xf < b),
        rise,
        jnp.where((b <= xf) & (xf <= c), fall, jnp.zeros_like(xf)),
    )
    return out.astype(x.dtype)


if __name__ == "__main__":
    # Parameters mirroring TriangularMembFunc.isosceles(width=1.0, center=0.0)
    # -> a=-1, b=0, c=1.
    a_val, b_val, c_val = -1.0, 0.0, 1.0

    key = jax.random.PRNGKey(0)
    x = jax.random.uniform(
        key, (2, 4, 16, 16), dtype=jnp.float32, minval=-2.0, maxval=2.0
    )
    # Exercise exact boundaries x==a, x==b, x==c and the NaN -> 0 branch.
    x = (
        x.at[0, 0, 0, 0].set(a_val)
        .at[0, 0, 0, 1].set(b_val)
        .at[0, 0, 0, 2].set(c_val)
        .at[0, 0, 0, 3].set(jnp.nan)
    )

    out = jax.block_until_ready(triangular_memb_func(x, a_val, b_val, c_val))
    ref = _reference(x, a_val, b_val, c_val)
    assert out.shape == x.shape and out.dtype == x.dtype
    assert jnp.allclose(out, ref, atol=1e-6, rtol=1e-6)

    # Ragged tail (n % lane_c != 0) + dtype-preserving bf16 path.
    xb = jax.random.uniform(
        jax.random.split(key)[0], (3, 5, 7), dtype=jnp.float32,
        minval=-2.0, maxval=2.0,
    ).astype(jnp.bfloat16)
    outb = jax.block_until_ready(triangular_memb_func(xb, a_val, b_val, c_val))
    refb = _reference(xb, a_val, b_val, c_val)
    assert outb.shape == xb.shape and outb.dtype == jnp.bfloat16
    assert jnp.allclose(
        outb.astype(jnp.float32), refb.astype(jnp.float32), atol=2e-2, rtol=2e-2
    )

    print("KERNEL_OK")
</pallas_src>

<mosaic_0001>
module attributes {stable_mosaic.version = 11 : i64} {
  func.func @_tri_mf_kernel(%arg0: i32, %arg1: memref<8x512xf32, #tpu.memory_space<vmem>>, %arg2: memref<8x512xf32, #tpu.memory_space<vmem>>) attributes {dimension_semantics = [#tpu.dimension_semantics<parallel>], iteration_bounds = array<i64: 1>, scalar_prefetch = 0 : i64, scratch_operands = 0 : i64, tpu.core_type = #tpu.core_type<tc>, window_params = [{transform_indices = @transform_0, window_bounds = array<i64: 8, 512>}, {transform_indices = @transform_1, window_bounds = array<i64: 8, 512>}]} {
    %c0 = arith.constant 0 : index
    %c0_0 = arith.constant 0 : index
    %0 = vector.load %arg1[%c0, %c0_0] : memref<8x512xf32, #tpu.memory_space<vmem>>, vector<8x512xf32>
    %cst = arith.constant -1.000000e+00 : f32
    %1 = vector.broadcast %cst : f32 to vector<8x512xf32>
    %2 = arith.subf %0, %1 : vector<8x512xf32>
    %cst_1 = arith.constant 1.000000e+00 : f32
    %3 = vector.broadcast %cst_1 : f32 to vector<8x512xf32>
    %4 = arith.mulf %2, %3 : vector<8x512xf32>
    %cst_2 = arith.constant 1.000000e+00 : f32
    %5 = vector.broadcast %cst_2 : f32 to vector<8x512xf32>
    %6 = arith.subf %5, %0 : vector<8x512xf32>
    %cst_3 = arith.constant 1.000000e+00 : f32
    %7 = vector.broadcast %cst_3 : f32 to vector<8x512xf32>
    %8 = arith.divf %6, %7 : vector<8x512xf32>
    %cst_4 = arith.constant -1.000000e+00 : f32
    %9 = vector.broadcast %cst_4 : f32 to vector<8x512xf32>
    %10 = arith.cmpf ogt, %0, %9 : vector<8x512xf32>
    %cst_5 = arith.constant 0.000000e+00 : f32
    %11 = vector.broadcast %cst_5 : f32 to vector<8x512xf32>
    %12 = arith.cmpf olt, %0, %11 : vector<8x512xf32>
    %13 = arith.andi %10, %12 : vector<8x512xi1>
    %cst_6 = arith.constant 0.000000e+00 : f32
    %14 = vector.broadcast %cst_6 : f32 to vector<8x512xf32>
    %15 = arith.cmpf oge, %0, %14 : vector<8x512xf32>
    %cst_7 = arith.constant 1.000000e+00 : f32
    %16 = vector.broadcast %cst_7 : f32 to vector<8x512xf32>
    %17 = arith.cmpf ole, %0, %16 : vector<8x512xf32>
    %18 = arith.andi %15, %17 : vector<8x512xi1>
    %cst_8 = arith.constant 0.000000e+00 : f32
    %19 = vector.broadcast %cst_8 : f32 to vector<8x512xf32>
    %20 = arith.select %18, %8, %19 : vector<8x512xi1>, vector<8x512xf32>
    %21 = arith.select %13, %4, %20 : vector<8x512xi1>, vector<8x512xf32>
    %c0_9 = arith.constant 0 : index
    %c0_10 = arith.constant 0 : index
    %22 = vector.load %arg2[%c0_9, %c0_10] : memref<8x512xf32, #tpu.memory_space<vmem>>, vector<8x512xf32>
    tpu.vector_store %arg2[%c0_9, %c0_10], %21 {strides = array<i32>} : memref<8x512xf32, #tpu.memory_space<vmem>>, vector<8x512xf32>,
    return
  }
  func.func @transform_0(%arg0: i32) -> (i32, i32) {
    %c0_i32 = arith.constant 0 : i32
    %c0_i32_0 = arith.constant 0 : i32
    return %arg0, %c0_i32 : i32, i32
  }
  func.func @transform_1(%arg0: i32) -> (i32, i32) {
    %c0_i32 = arith.constant 0 : i32
    %c0_i32_0 = arith.constant 0 : i32
    return %arg0, %c0_i32 : i32, i32
  }
}

</mosaic_0001>

<llo_original>
// kernel: tpu_custom_call.1
$region0: #{tpu_custom_call.1}
  #allocation0 [shape = 'u32[]', space=smem, size = 0x4, offset = 0x4, fixed_abs, tag = 'smem constant byte address 0x4 - core index']
  #allocation1 [shape = 'u32[144,128]{1,0:T(1,128)}', space=vmem, size = 0x12000, scoped, tag = 'internal scratch']
  %s0 = inlined_call_operand.hbm [shape: f32[4,512], index: 0, kind: input, shape index: {}]
  %s1 = inlined_call_operand.hbm [shape: f32[4,512], index: 1, kind: output, shape index: {}]
  %s2 = sld [smem:[#allocation0]]
  $region18: #{tpu_custom_call.1} parent=0
    _
  %s4 = ssub.s32 1, %s2
  %s5 = scalar_select 0, %s4, %s2
  $region1: #{tpu_custom_call.1} parent=0
    #allocation2 [shape = 'u8[16384]{0}', space=vmem, size = 0x4000, scoped, tag = 'input window, operand 0, single buffered']
    #allocation3 [shape = 's32[1]{0}', space=sflag, size = 0x4, scoped, tag = 'scoped memory for tpu_custom_call.1']
    #allocation4 [shape = 's32[1]{0}', space=sflag, size = 0x4, scoped, tag = 'scoped memory for tpu_custom_call.1']
    #allocation5 [shape = 'u8[16384]{0}', space=vmem, size = 0x4000, scoped, tag = 'output window, operand 0, single buffered']
    %6 = vsyncpa [#allocation3], 0
    %7 = vsyncpa [#allocation4], 0
    // Predicated region
    $region2: #{tpu_custom_call.1} parent=1 // pred_check
      _
    $region3: #{tpu_custom_call.1} parent=1 // pred_check_branch
      %9 = sbr.rel (0) target = $region5
    $region4: #{tpu_custom_call.1} parent=1 // pred_region
      %s11 = ssub.s32 512, 256
      %12 = vsyncadd [#allocation3], %s11
      %s13 = sshll.u32 [#allocation2], 4
      %s14 = int_to_ptr.vmem [resolvable:$true] %s13
      %19 = dma.hbm_to_vmem [thread:$0]  %s0, 256, %s14, [#allocation3], 256, 256, 16
    $region5: #{tpu_custom_call.1} parent=1 // pred_fallthru
      _
    // Predicated region
    $region6: #{tpu_custom_call.1} parent=1 // pred_check
      _
    $region7: #{tpu_custom_call.1} parent=1 // pred_check_branch
      %21 = sbr.rel (0) target = $region9
    $region8: #{tpu_custom_call.1} parent=1 // pred_region
      %22 = dma.done [#allocation3], 512
    $region9: #{tpu_custom_call.1} parent=1 // pred_fallthru
      _
    %v23 = vld [vmem:[#allocation2] sm:$0xff]
    %v24 = vld [vmem:[#allocation2 + $0x8] sm:$0xff]
    %v25 = vld [vmem:[#allocation2 + $0x10] sm:$0xff]
    %v26 = vld [vmem:[#allocation2 + $0x18] sm:$0xff]
    %v27 = vsub.f32 %v23, -1.0
    %v28 = vsub.f32 %v24, -1.0
    %v29 = vsub.f32 %v25, -1.0
    %v30 = vsub.f32 %v26, -1.0
    %v31 = vsub.f32 1.0, %v23
    %v32 = vsub.f32 1.0, %v24
    %v33 = vsub.f32 1.0, %v25
    %v34 = vsub.f32 1.0, %v26
    %vm35 = vcmp.gt.f32.partialorder %v23, -1.0
    %vm36 = vcmp.gt.f32.partialorder %v24, -1.0
    %vm37 = vcmp.gt.f32.partialorder %v25, -1.0
    %vm38 = vcmp.gt.f32.partialorder %v26, -1.0
    %vm39 = vcmp.lt.f32.partialorder %v23, 0.0
    %vm40 = vcmp.lt.f32.partialorder %v24, 0.0
    %vm41 = vcmp.lt.f32.partialorder %v25, 0.0
    %vm42 = vcmp.lt.f32.partialorder %v26, 0.0
    %vm43 = vmand %vm35, %vm39
    %vm44 = vmand %vm36, %vm40
    %vm45 = vmand %vm37, %vm41
    %vm46 = vmand %vm38, %vm42
    %vm47 = vcmp.ge.f32.partialorder %v23, 0.0
    %vm48 = vcmp.ge.f32.partialorder %v24, 0.0
    %vm49 = vcmp.ge.f32.partialorder %v25, 0.0
    %vm50 = vcmp.ge.f32.partialorder %v26, 0.0
    %vm51 = vcmp.le.f32.partialorder %v23, 1.0
    %vm52 = vcmp.le.f32.partialorder %v24, 1.0
    %vm53 = vcmp.le.f32.partialorder %v25, 1.0
    %vm54 = vcmp.le.f32.partialorder %v26, 1.0
    %vm55 = vmand %vm47, %vm51
    %vm56 = vmand %vm48, %vm52
    %vm57 = vmand %vm49, %vm53
    %vm58 = vmand %vm50, %vm54
    %v59 = vsel %vm55, %v31, 0.0
    %v60 = vsel %vm56, %v32, 0.0
    %v61 = vsel %vm57, %v33, 0.0
    %v62 = vsel %vm58, %v34, 0.0
    %v63 = vsel %vm43, %v27, %v59
    %v64 = vsel %vm44, %v28, %v60
    %v65 = vsel %vm45, %v29, %v61
    %v66 = vsel %vm46, %v30, %v62
    %67 = vst [vmem:[#allocation5] sm:$0xff] %v63
    %68 = vst [vmem:[#allocation5 + $0x8] sm:$0xff] %v64
    %69 = vst [vmem:[#allocation5 + $0x10] sm:$0xff] %v65
    %70 = vst [vmem:[#allocation5 + $0x18] sm:$0xff] %v66
    // Predicated region
    $region10: #{tpu_custom_call.1} parent=1 // pred_check
      _
    $region11: #{tpu_custom_call.1} parent=1 // pred_check_branch
      %72 = sbr.rel (0) target = $region13
    $region12: #{tpu_custom_call.1} parent=1 // pred_region
      %s74 = ssub.s32 512, 256
      %75 = vsyncadd [#allocation4], %s74
      %s76 = sshll.u32 [#allocation5], 4
      %s77 = int_to_ptr.vmem [resolvable:$true] %s76
      %82 = dma.vmem_to_hbm [thread:$0]  %s77, 256, %s1, [#allocation4], 256, 256, 16
    $region13: #{tpu_custom_call.1} parent=1 // pred_fallthru
      _
    // Predicated region
    $region14: #{tpu_custom_call.1} parent=1 // pred_check
      _
    $region15: #{tpu_custom_call.1} parent=1 // pred_check_branch
      %84 = sbr.rel (0) target = $region17
    $region16: #{tpu_custom_call.1} parent=1 // pred_region
      %85 = dma.done [#allocation4], 512
    $region17: #{tpu_custom_call.1} parent=1 // pred_fallthru
      _
    %86 = vsyncpa [#allocation3], 1
    %87 = vsyncpa [#allocation4], 1

</llo_original>
